<compile_context>
chip_gen: v7x
topology: tpu7x:2x2x1
jax: 0.10.0
libtpu: 0.0.40
codegen_flags: <defaults>
</compile_context>

<pallas_src>
import functools

import jax
import jax.numpy as jnp
from jax.experimental import pallas as pl
from jax.experimental.pallas import tpu as pltpu

LANES = 128
SUBLANES = 8


def _make_l1_sum_kernel(block_rows, acc_rows, total_rows, blocks_per_core,
                        need_mask):
    """Kernel for a static tile height / accumulator height / row count."""

    def kernel(x_ref, d_ref, o_ref, acc_ref):
        i = pl.program_id(1)

        @pl.when(i == 0)
        def _():
            acc_ref[...] = jnp.zeros_like(acc_ref)

        a = jnp.abs(x_ref[...].astype(jnp.float32) -
                    d_ref[...].astype(jnp.float32))

        if need_mask:
            # Zero rows belonging to the (partially / fully) out-of-bounds
            # boundary blocks; data Pallas DMAs past the array end is garbage.
            c = pl.program_id(0)
            blk = c * blocks_per_core + i       # un-clamped global block id
            row_ids = blk * block_rows + jax.lax.broadcasted_iota(
                jnp.int32, a.shape, 0)
            a = jnp.where(row_ids < total_rows, a, 0.0)

        if block_rows > acc_rows:
            # Fold the tile into a wide accumulator: leading-axis sum is pure
            # VPU adds across independent vregs (ILP-friendly, no cross-lane).
            acc_ref[...] += a.reshape(block_rows // acc_rows, acc_rows,
                                      LANES).sum(axis=0)
        else:
            acc_ref[...] += a

        @pl.when(i == pl.num_programs(1) - 1)
        def _():
            # Per-core partial sums; final scalar reduce happens in the wrapper.
            o_ref[...] = acc_ref[...]

    return kernel


@functools.partial(jax.jit, static_argnames=("block_rows",))
def l1_loss_sum(x, d, *, block_rows=4096):
    assert x.shape == d.shape, "L1Loss expects x and d with identical shapes"
    out_dtype = jnp.result_type(x.dtype, d.dtype)

    n = x.size
    fx = jnp.ravel(x)            # free for contiguous inputs; native dtype kept
    fd = jnp.ravel(d)

    rem = n % LANES
    prefix = n - rem
    tail = jnp.float32(0.0)
    if rem:
        # <128-element tail handled with plain jnp (essentially free).
        tail = jnp.sum(jnp.abs(fx[prefix:].astype(jnp.float32) -
                               fd[prefix:].astype(jnp.float32)))
    if prefix == 0:
        return tail.astype(out_dtype)

    rows = prefix // LANES
    xs = (fx[:prefix] if rem else fx).reshape(rows, LANES)
    ds = (fd[:prefix] if rem else fd).reshape(rows, LANES)

    # Dtype-aware sublane multiple (f32: 8, bf16/f16: 16, int8/fp8: 32).
    min_item = min(jnp.dtype(x.dtype).itemsize, jnp.dtype(d.dtype).itemsize)
    subm = max(SUBLANES, 32 // max(min_item, 1))

    # Tile height: big (HBM roofline) but a multiple of the packed sublane
    # count, or the whole slab when it is small (full-extent block is legal).
    br = min(block_rows, rows)
    if br < rows:
        br = max(subm, (br // subm) * subm)
        br = min(br, rows)
    num_blocks = -(-rows // br)

    # Split the block range across two cores (v7x megacore); on 1-TC chips the
    # "parallel" axis is just a partitioned serial loop.
    cores = 2 if num_blocks >= 2 else 1
    bpc = -(-num_blocks // cores)
    need_mask = (cores * bpc * br) != rows

    # Wide accumulator: 32 rows when possible (breaks the serial add chain).
    if br % 32 == 0:
        acc_rows = 32
    elif br % SUBLANES == 0:
        acc_rows = SUBLANES
    else:
        acc_rows = br            # only reachable when cores == 1 (full block)

    kernel = _make_l1_sum_kernel(br, acc_rows, rows, bpc, need_mask)
    last_block = num_blocks - 1

    def in_map(c, i):
        # Clamp fully-OOB overflow blocks of the second core; their
        # contribution is zeroed by the in-kernel row mask.
        return (jnp.minimum(c * bpc + i, last_block), 0)

    def out_map(c, i):
        return (c, 0)

    itemsizes = jnp.dtype(x.dtype).itemsize + jnp.dtype(d.dtype).itemsize
    cost = pl.CostEstimate(
        flops=3 * prefix,                         # sub + abs + add per element
        transcendentals=0,
        bytes_accessed=prefix * itemsizes + cores * acc_rows * LANES * 4)

    # VMEM budget: 2 inputs x 2 pipeline buffers + accumulator + output, with
    # headroom; capped below v7x's 64 MiB physical VMEM.
    in_tile_bytes = br * LANES * itemsizes
    vmem_need = 2 * in_tile_bytes + 2 * acc_rows * LANES * 4 + (1 << 20)
    vmem_limit = int(min(max(vmem_need, 32 * 2**20), 56 * 2**20))

    out = pl.pallas_call(
        kernel,
        out_shape=jax.ShapeDtypeStruct((cores * acc_rows, LANES), jnp.float32),
        grid_spec=pltpu.PrefetchScalarGridSpec(
            num_scalar_prefetch=0,
            grid=(cores, bpc),
            in_specs=[
                pl.BlockSpec((br, LANES), in_map),
                pl.BlockSpec((br, LANES), in_map),
            ],
            out_specs=pl.BlockSpec((acc_rows, LANES), out_map),
            scratch_shapes=[pltpu.VMEM((acc_rows, LANES), jnp.float32)],
        ),
        compiler_params=pltpu.CompilerParams(
            dimension_semantics=("parallel", "arbitrary"),
            vmem_limit_bytes=vmem_limit,
        ),
        cost_estimate=cost,
    )(xs, ds)

    return (jnp.sum(out) + tail).astype(out_dtype)


if __name__ == "__main__":
    key = jax.random.PRNGKey(0)
    kx, kd = jax.random.split(key)

    # Small shapes consistent with a generic (B, C, H, W) prediction/target pair.
    shape = (2, 4, 16, 16)
    x = jax.random.normal(kx, shape, dtype=jnp.float32)
    d = jax.random.normal(kd, shape, dtype=jnp.float32)

    loss = jax.block_until_ready(l1_loss_sum(x, d))
    ref = jnp.sum(jnp.abs(x - d))
    # fp32 sums in a different association order differ at the ~1e-6 relative
    # level; use a tolerance that reflects that instead of bitwise-ish atol.
    assert jnp.allclose(loss, ref, rtol=1e-5, atol=1e-4), (loss, ref)

    # Exercise the non-lane-aligned tail + masked boundary block + 2-core split.
    shape2 = (3, 5, 17, 13)
    x2 = jax.random.normal(kx, shape2, dtype=jnp.float32)
    d2 = jax.random.normal(kd, shape2, dtype=jnp.float32)
    loss2 = jax.block_until_ready(l1_loss_sum(x2, d2, block_rows=8))
    ref2 = jnp.sum(jnp.abs(x2 - d2))
    assert jnp.allclose(loss2, ref2, rtol=1e-5, atol=1e-4), (loss2, ref2)

    print("KERNEL_OK")
</pallas_src>

<mosaic_0001>
module attributes {stable_mosaic.version = 11 : i64} {
  func.func @kernel(%arg0: i32, %arg1: i32, %arg2: memref<16x128xf32, #tpu.memory_space<vmem>>, %arg3: memref<16x128xf32, #tpu.memory_space<vmem>>, %arg4: memref<8x128xf32, #tpu.memory_space<vmem>>, %arg5: memref<8x128xf32, #tpu.memory_space<vmem>>) attributes {dimension_semantics = [#tpu.dimension_semantics<parallel>, #tpu.dimension_semantics<arbitrary>], iteration_bounds = array<i64: 1, 1>, scalar_prefetch = 0 : i64, scratch_operands = 1 : i64, tpu.core_type = #tpu.core_type<tc>, window_params = [{transform_indices = @transform_0, window_bounds = array<i64: 16, 128>}, {transform_indices = @transform_1, window_bounds = array<i64: 16, 128>}, {transform_indices = @transform_2, window_bounds = array<i64: 8, 128>}]} {
    %c0_i32 = arith.constant 0 : i32
    %0 = arith.cmpi eq, %arg1, %c0_i32 : i32
    %1 = arith.extui %0 : i1 to i32
    %c0_i32_0 = arith.constant 0 : i32
    %2 = arith.cmpi ne, %1, %c0_i32_0 : i32
    scf.if %2 {
      %cst_10 = arith.constant 0.000000e+00 : f32
      %15 = vector.broadcast %cst_10 : f32 to vector<8x128xf32>
      %c0_11 = arith.constant 0 : index
      %c0_12 = arith.constant 0 : index
      %16 = vector.load %arg5[%c0_11, %c0_12] : memref<8x128xf32, #tpu.memory_space<vmem>>, vector<8x128xf32>
      tpu.vector_store %arg5[%c0_11, %c0_12], %15 {strides = array<i32>} : memref<8x128xf32, #tpu.memory_space<vmem>>, vector<8x128xf32>,
    } else {
    }
    %c0 = arith.constant 0 : index
    %c0_1 = arith.constant 0 : index
    %3 = vector.load %arg2[%c0, %c0_1] : memref<16x128xf32, #tpu.memory_space<vmem>>, vector<16x128xf32>
    %c0_2 = arith.constant 0 : index
    %c0_3 = arith.constant 0 : index
    %4 = vector.load %arg3[%c0_2, %c0_3] : memref<16x128xf32, #tpu.memory_space<vmem>>, vector<16x128xf32>
    %5 = arith.subf %3, %4 : vector<16x128xf32>
    %6 = math.absf %5 : vector<16x128xf32>
    %c0_4 = arith.constant 0 : index
    %c0_5 = arith.constant 0 : index
    %7 = vector.load %arg5[%c0_4, %c0_5] : memref<8x128xf32, #tpu.memory_space<vmem>>, vector<8x128xf32>
    %8 = vector.shape_cast %6 : vector<16x128xf32> to vector<2x8x128xf32>
    %cst = arith.constant dense<0.000000e+00> : vector<8x128xf32>
    %9 = vector.multi_reduction <add>, %8, %cst [0] : vector<2x8x128xf32> to vector<8x128xf32>
    %10 = arith.addf %7, %9 : vector<8x128xf32>
    %c0_6 = arith.constant 0 : index
    %c0_7 = arith.constant 0 : index
    %11 = vector.load %arg5[%c0_6, %c0_7] : memref<8x128xf32, #tpu.memory_space<vmem>>, vector<8x128xf32>
    tpu.vector_store %arg5[%c0_6, %c0_7], %10 {strides = array<i32>} : memref<8x128xf32, #tpu.memory_space<vmem>>, vector<8x128xf32>,
    %c0_i32_8 = arith.constant 0 : i32
    %12 = arith.cmpi eq, %arg1, %c0_i32_8 : i32
    %13 = arith.extui %12 : i1 to i32
    %c0_i32_9 = arith.constant 0 : i32
    %14 = arith.cmpi ne, %13, %c0_i32_9 : i32
    scf.if %14 {
      %c0_10 = arith.constant 0 : index
      %c0_11 = arith.constant 0 : index
      %15 = vector.load %arg5[%c0_10, %c0_11] : memref<8x128xf32, #tpu.memory_space<vmem>>, vector<8x128xf32>
      %c0_12 = arith.constant 0 : index
      %c0_13 = arith.constant 0 : index
      %16 = vector.load %arg4[%c0_12, %c0_13] : memref<8x128xf32, #tpu.memory_space<vmem>>, vector<8x128xf32>
      tpu.vector_store %arg4[%c0_12, %c0_13], %15 {strides = array<i32>} : memref<8x128xf32, #tpu.memory_space<vmem>>, vector<8x128xf32>,
    } else {
    }
    return
  }
  func.func @transform_0(%arg0: i32, %arg1: i32) -> (i32, i32) {
    %c1_i32 = arith.constant 1 : i32
    %0 = arith.muli %arg0, %c1_i32 : i32
    %1 = arith.addi %0, %arg1 : i32
    %c0_i32 = arith.constant 0 : i32
    %2 = arith.minsi %1, %c0_i32 : i32
    %c0_i32_0 = arith.constant 0 : i32
    %c0_i32_1 = arith.constant 0 : i32
    return %2, %c0_i32_0 : i32, i32
  }
  func.func @transform_1(%arg0: i32, %arg1: i32) -> (i32, i32) {
    %c1_i32 = arith.constant 1 : i32
    %0 = arith.muli %arg0, %c1_i32 : i32
    %1 = arith.addi %0, %arg1 : i32
    %c0_i32 = arith.constant 0 : i32
    %2 = arith.minsi %1, %c0_i32 : i32
    %c0_i32_0 = arith.constant 0 : i32
    %c0_i32_1 = arith.constant 0 : i32
    return %2, %c0_i32_0 : i32, i32
  }
  func.func @transform_2(%arg0: i32, %arg1: i32) -> (i32, i32) {
    %c0_i32 = arith.constant 0 : i32
    %c0_i32_0 = arith.constant 0 : i32
    return %arg0, %c0_i32 : i32, i32
  }
}

</mosaic_0001>

<llo_original>
// kernel: l1_loss_sum.1
$region0: #{l1_loss_sum.1}
  #allocation0 [shape = 'u32[]', space=smem, size = 0x4, offset = 0x4, fixed_abs, tag = 'smem constant byte address 0x4 - core index']
  #allocation1 [shape = 'u32[144,128]{1,0:T(1,128)}', space=vmem, size = 0x12000, scoped, tag = 'internal scratch']
  #allocation2 [shape = 'f32[8,128]{1,0:T(8,128)}', space=vmem, size = 0x1000, scoped, tag = 'scratch operand']
  %s0 = inlined_call_operand.vmem [shape: f32[16,128], index: 0, kind: input, shape index: {}]
  %s1 = inlined_call_operand.vmem [shape: f32[16,128], index: 1, kind: input, shape index: {}]
  %s2 = inlined_call_operand.vmem [shape: f32[8,128], index: 2, kind: output, shape index: {}]
  %s3 = sld [smem:[#allocation0]]
  $region26: #{l1_loss_sum.1} parent=0
    _
  %s5 = ssub.s32 1, %s3
  %s6 = scalar_select 0, %s5, %s3
  // Predicated region
  $region2: #{l1_loss_sum.1} parent=0 // pred_check
    _
  $region3: #{l1_loss_sum.1} parent=0 // pred_check_branch
    %8 = sbr.rel (0) target = $region5
  $region4: #{l1_loss_sum.1} parent=0 // pred_region
    %s9 = sadd.s32 0, 0
    %p10 = scmp.lt.s32.totalorder %s9, 0
    %s11 = scalar_select %p10, %s9, 0
    %s12 = smul.u32 2, %s11
    %p13 = scmp.lt.s32.totalorder %s12, 1
    %s14 = scalar_select %p13, %s12, 1
    %s15 = smul.addr %s14, 8
    %s16 = scalar_lea.vmem %s0, %s15
    %s17 = sadd.s32 0, 0
    %p18 = scmp.lt.s32.totalorder %s17, 0
    %s19 = scalar_select %p18, %s17, 0
    %s20 = smul.u32 2, %s19
  $region5: #{l1_loss_sum.1} parent=0 // pred_fallthru
    _
  // Predicated region
  $region6: #{l1_loss_sum.1} parent=0 // pred_check
    _
  $region7: #{l1_loss_sum.1} parent=0 // pred_check_branch
    %22 = sbr.rel (0) target = $region9
  $region8: #{l1_loss_sum.1} parent=0 // pred_region
    %s23 = sadd.s32 0, 0
    %p24 = scmp.lt.s32.totalorder %s23, 0
    %s25 = scalar_select %p24, %s23, 0
    %s26 = smul.u32 2, %s25
    %p27 = scmp.lt.s32.totalorder %s26, 1
    %s28 = scalar_select %p27, %s26, 1
    %s29 = smul.addr %s28, 8
    %s30 = scalar_lea.vmem %s1, %s29
    %s31 = sadd.s32 0, 0
    %p32 = scmp.lt.s32.totalorder %s31, 0
    %s33 = scalar_select %p32, %s31, 0
    %s34 = smul.u32 2, %s33
  $region9: #{l1_loss_sum.1} parent=0 // pred_fallthru
    _
  %s35 = sadd.s32 0, 0
  %p36 = scmp.lt.s32.totalorder %s35, 0
  %s37 = scalar_select %p36, %s35, 0
  %s38 = smul.u32 2, %s37
  %p39 = scmp.lt.s32.totalorder %s38, 1
  %s40 = scalar_select %p39, %s38, 1
  %s41 = smul.addr %s40, 8
  %s42 = scalar_lea.vmem %s0, %s41
  %s43 = sadd.s32 0, 0
  %p44 = scmp.lt.s32.totalorder %s43, 0
  %s45 = scalar_select %p44, %s43, 0
  %s46 = smul.u32 2, %s45
  %p47 = scmp.lt.s32.totalorder %s46, 1
  %s48 = scalar_select %p47, %s46, 1
  %s49 = smul.addr %s48, 8
  %s50 = scalar_lea.vmem %s1, %s49
  %s51 = sadd.s32 0, 0
  %p52 = scmp.lt.s32.totalorder %s51, 0
  %s53 = scalar_select %p52, %s51, 0
  %s54 = smul.u32 2, %s53
  %p55 = scmp.lt.s32.totalorder %s54, 1
  %s56 = scalar_select %p55, %s54, 1
  %s57 = smul.addr %s56, 8
  %s58 = scalar_lea.vmem %s0, %s57
  %s59 = sadd.s32 0, 0
  %p60 = scmp.lt.s32.totalorder %s59, 0
  %s61 = scalar_select %p60, %s59, 0
  %s62 = smul.u32 2, %s61
  %s63 = sadd.s32 0, 0
  %p64 = scmp.lt.s32.totalorder %s63, 0
  %s65 = scalar_select %p64, %s63, 0
  %s66 = smul.u32 2, %s65
  %p67 = scmp.lt.s32.totalorder %s66, 1
  %s68 = scalar_select %p67, %s66, 1
  %s69 = smul.addr %s68, 8
  %s70 = scalar_lea.vmem %s1, %s69
  %s71 = sadd.s32 0, 0
  %p72 = scmp.lt.s32.totalorder %s71, 0
  %s73 = scalar_select %p72, %s71, 0
  %s74 = smul.u32 2, %s73
  %p75 = scmp.eq.s32.totalorder 0, 0
  // Predicated region
  $region10: #{l1_loss_sum.1} parent=0 // pred_check
    %p76 = pneg %p75
  $region11: #{l1_loss_sum.1} parent=0 // pred_check_branch
    %78 = sbr.rel (%p76) target = $region13
  $region12: #{l1_loss_sum.1} parent=0 // pred_region
    %79 = vst [vmem:[#allocation2] sm:$0xff] 0.0
  $region13: #{l1_loss_sum.1} parent=0 // pred_fallthru
    _
  %v80 = vld [vmem:[%s58] sm:$0xff]
  %v81 = vld [vmem:[%s58 + $0x8] sm:$0xff]
  %v82 = vld [vmem:[%s70] sm:$0xff]
  %v83 = vld [vmem:[%s70 + $0x8] sm:$0xff]
  %v84 = vsub.f32 %v80, %v82
  %v85 = vsub.f32 %v81, %v83
  %v86 = vand.u32 2147483647, %v84
  %v87 = vand.u32 2147483647, %v85
  %v88 = vld [vmem:[#allocation2] sm:$0xff]
  %v89 = vadd.f32 %v86, %v87
  %v90 = vadd.f32 %v88, %v89
  %91 = vst [vmem:[#allocation2] sm:$0xff] %v90
  // Predicated region
  $region14: #{l1_loss_sum.1} parent=0 // pred_check
    %p92 = pneg %p75
  $region15: #{l1_loss_sum.1} parent=0 // pred_check_branch
    %94 = sbr.rel (%p92) target = $region17
  $region16: #{l1_loss_sum.1} parent=0 // pred_region
    %v95 = vld [vmem:[#allocation2] sm:$0xff]
    %96 = vst [vmem:[%s2] sm:$0xff] %v95
  $region17: #{l1_loss_sum.1} parent=0 // pred_fallthru
    _
  // Predicated region
  $region18: #{l1_loss_sum.1} parent=0 // pred_check
    _
  $region19: #{l1_loss_sum.1} parent=0 // pred_check_branch
    %98 = sbr.rel (0) target = $region21
  $region20: #{l1_loss_sum.1} parent=0 // pred_region
    _
  $region21: #{l1_loss_sum.1} parent=0 // pred_fallthru
    _
  // Predicated region
  $region22: #{l1_loss_sum.1} parent=0 // pred_check
    _
  $region23: #{l1_loss_sum.1} parent=0 // pred_check_branch
    %100 = sbr.rel (0) target = $region25
  $region24: #{l1_loss_sum.1} parent=0 // pred_region
    _
  $region25: #{l1_loss_sum.1} parent=0 // pred_fallthru
    _

</llo_original>
